<compile_context>
chip_gen: v6e
topology: v6e:2x2x1
jax: 0.10.0
libtpu: 0.0.40
codegen_flags: <defaults>
</compile_context>

<pallas_src>
from functools import partial

import jax
import jax.numpy as jnp
from jax.experimental import pallas as pl
from jax.experimental.pallas import tpu as pltpu


def _round_up(x: int, m: int) -> int:
    return ((x + m - 1) // m) * m


def _mlp_kernel(*refs, n_layers: int):
    # refs = (x_ref, w0, b0, w1, b1, ..., w_{L-1}, b_{L-1}, o_ref)
    x_ref = refs[0]
    o_ref = refs[-1]
    h = x_ref[...]  # bf16 activation tile (TM, K0)
    for i in range(n_layers):
        w_ref = refs[1 + 2 * i]   # (K_i, N_i) bf16, resident in VMEM
        b_ref = refs[2 + 2 * i]   # (1, N_i)  f32
        acc = jnp.dot(h, w_ref[...], preferred_element_type=jnp.float32)
        acc = acc + b_ref[...]    # f32 epilogue
        if i < n_layers - 1:
            h = jnp.maximum(acc, 0.0).astype(jnp.bfloat16)  # ReLU, back to bf16 for MXU
        else:
            o_ref[...] = acc.astype(o_ref.dtype)            # only final (small-N) write hits HBM


def mlp_forward(x, params, *, tm: int = 256):
    """Fused MLP forward. x is NCHW; flattened row-major like torch's x.view(B, -1)."""
    B = x.shape[0]
    h = x.reshape(B, -1)
    K0 = h.shape[1]
    n_layers = len(params)
    N_out = params[-1][0].shape[1]

    # bf16 matmul operands, f32 bias.
    h_bf = h.astype(jnp.bfloat16)
    w_bf = [w_t.astype(jnp.bfloat16) for (w_t, _) in params]
    b_2d = [b.reshape(1, -1).astype(jnp.float32) for (_, b) in params]

    # Row tile: multiple of 16 (bf16 sublane packing), capped at `tm`.
    TM = min(_round_up(tm, 16), _round_up(B, 16))
    M_pad = _round_up(B, TM)
    if M_pad != B:
        h_bf = jnp.pad(h_bf, ((0, M_pad - B), (0, 0)))
    grid = (M_pad // TM,)

    in_specs = [pl.BlockSpec((TM, K0), lambda i: (i, 0))]
    flat_inputs = [h_bf]
    for w, b in zip(w_bf, b_2d):
        Kw, Nw = w.shape
        in_specs.append(pl.BlockSpec((Kw, Nw), lambda i: (0, 0)))  # weights stay resident
        in_specs.append(pl.BlockSpec((1, Nw), lambda i: (0, 0)))
        flat_inputs.extend([w, b])

    out = pl.pallas_call(
        partial(_mlp_kernel, n_layers=n_layers),
        out_shape=jax.ShapeDtypeStruct((M_pad, N_out), jnp.float32),
        grid=grid,
        in_specs=in_specs,
        out_specs=pl.BlockSpec((TM, N_out), lambda i: (i, 0)),
        compiler_params=pltpu.CompilerParams(
            dimension_semantics=("parallel",)),  # shards batch tiles across v7x's 2 TCs
    )(*flat_inputs)
    return out[:B]


def init_mlp_params(key, feature_dim, layer_widths):
    """Deterministic init mimicking torch.nn.Linear default (uniform(+-1/sqrt(fan_in)))."""
    lin_dims = [feature_dim] + list(layer_widths)
    params = []
    for i in range(len(layer_widths)):
        fan_in, fan_out = lin_dims[i], lin_dims[i + 1]
        key, kw, kb = jax.random.split(key, 3)
        bound = 1.0 / jnp.sqrt(jnp.float32(fan_in))
        # store weight already transposed: (in_features, out_features)
        w_t = jax.random.uniform(kw, (fan_in, fan_out), jnp.float32, -bound, bound)
        b = jax.random.uniform(kb, (fan_out,), jnp.float32, -bound, bound)
        params.append((w_t, b))
    return params


if __name__ == "__main__":
    key = jax.random.PRNGKey(0)
    kx, kp = jax.random.split(key)

    # Small example consistent with the module: NCHW input, flattened inside forward.
    batch, C, H, W = 2, 4, 16, 16
    feature_dim = C * H * W          # 1024
    layer_widths = [32, 32, 16]

    x = jax.random.normal(kx, (batch, C, H, W), jnp.float32)
    params = init_mlp_params(kp, feature_dim, layer_widths)

    out = mlp_forward(x, params)
    out = jax.block_until_ready(out)
    assert out.shape == (batch, layer_widths[-1])

    # Reference in plain JAX using the same bf16-operand / f32-accumulate scheme.
    h_ref = x.reshape(batch, -1)
    for i, (w_t, b) in enumerate(params):
        acc = jnp.dot(h_ref.astype(jnp.bfloat16), w_t.astype(jnp.bfloat16),
                      preferred_element_type=jnp.float32) + b
        if i < len(params) - 1:
            acc = jnp.maximum(acc, 0.0)
        h_ref = acc
    assert jnp.allclose(out, h_ref, atol=1e-2, rtol=1e-2), \
        f"max abs err {jnp.max(jnp.abs(out - h_ref))}"

    print("KERNEL_OK")
</pallas_src>

<mosaic_0001>
module attributes {stable_mosaic.version = 11 : i64} {
  func.func @_mlp_kernel(%arg0: i32, %arg1: memref<16x1024xbf16, #tpu.memory_space<vmem>>, %arg2: memref<1024x32xbf16, #tpu.memory_space<vmem>>, %arg3: memref<1x32xf32, #tpu.memory_space<vmem>>, %arg4: memref<32x32xbf16, #tpu.memory_space<vmem>>, %arg5: memref<1x32xf32, #tpu.memory_space<vmem>>, %arg6: memref<32x16xbf16, #tpu.memory_space<vmem>>, %arg7: memref<1x16xf32, #tpu.memory_space<vmem>>, %arg8: memref<16x16xf32, #tpu.memory_space<vmem>>) attributes {dimension_semantics = [#tpu.dimension_semantics<parallel>], iteration_bounds = array<i64: 1>, scalar_prefetch = 0 : i64, scratch_operands = 0 : i64, tpu.core_type = #tpu.core_type<tc>, window_params = [{transform_indices = @transform_0, window_bounds = array<i64: 16, 1024>}, {pipeline_mode = #tpu.pipeline_mode<synchronous>, transform_indices = @transform_1, window_bounds = array<i64: 1024, 32>}, {pipeline_mode = #tpu.pipeline_mode<synchronous>, transform_indices = @transform_2, window_bounds = array<i64: 1, 32>}, {pipeline_mode = #tpu.pipeline_mode<synchronous>, transform_indices = @transform_3, window_bounds = array<i64: 32, 32>}, {pipeline_mode = #tpu.pipeline_mode<synchronous>, transform_indices = @transform_4, window_bounds = array<i64: 1, 32>}, {pipeline_mode = #tpu.pipeline_mode<synchronous>, transform_indices = @transform_5, window_bounds = array<i64: 32, 16>}, {pipeline_mode = #tpu.pipeline_mode<synchronous>, transform_indices = @transform_6, window_bounds = array<i64: 1, 16>}, {transform_indices = @transform_7, window_bounds = array<i64: 16, 16>}]} {
    %c0 = arith.constant 0 : index
    %c0_0 = arith.constant 0 : index
    %0 = vector.load %arg1[%c0, %c0_0] : memref<16x1024xbf16, #tpu.memory_space<vmem>>, vector<16x1024xbf16>
    %c0_1 = arith.constant 0 : index
    %c0_2 = arith.constant 0 : index
    %1 = vector.load %arg2[%c0_1, %c0_2] : memref<1024x32xbf16, #tpu.memory_space<vmem>>, vector<1024x32xbf16>
    %cst = arith.constant dense<0.000000e+00> : vector<16x32xf32>
    %2 = tpu.matmul %0, %1, %cst {dimension_numbers = #tpu.dot_dimension_numbers<[1], [0], [0], [1], [0, 0, 1, 1], [], []>} : vector<16x1024xbf16>, vector<1024x32xbf16>, vector<16x32xf32> -> vector<16x32xf32>
    %c0_3 = arith.constant 0 : index
    %c0_4 = arith.constant 0 : index
    %3 = vector.load %arg3[%c0_3, %c0_4] : memref<1x32xf32, #tpu.memory_space<vmem>>, vector<1x32xf32>
    %4 = vector.broadcast %3 : vector<1x32xf32> to vector<16x32xf32>
    %5 = arith.addf %2, %4 : vector<16x32xf32>
    %cst_5 = arith.constant 0.000000e+00 : f32
    %6 = vector.broadcast %cst_5 : f32 to vector<16x32xf32>
    %7 = arith.maximumf %5, %6 : vector<16x32xf32>
    %8 = arith.truncf %7 : vector<16x32xf32> to vector<16x32xbf16>
    %c0_6 = arith.constant 0 : index
    %c0_7 = arith.constant 0 : index
    %9 = vector.load %arg4[%c0_6, %c0_7] : memref<32x32xbf16, #tpu.memory_space<vmem>>, vector<32x32xbf16>
    %cst_8 = arith.constant dense<0.000000e+00> : vector<16x32xf32>
    %10 = tpu.matmul %8, %9, %cst_8 {dimension_numbers = #tpu.dot_dimension_numbers<[1], [0], [0], [1], [0, 0, 1, 1], [], []>} : vector<16x32xbf16>, vector<32x32xbf16>, vector<16x32xf32> -> vector<16x32xf32>
    %c0_9 = arith.constant 0 : index
    %c0_10 = arith.constant 0 : index
    %11 = vector.load %arg5[%c0_9, %c0_10] : memref<1x32xf32, #tpu.memory_space<vmem>>, vector<1x32xf32>
    %12 = vector.broadcast %11 : vector<1x32xf32> to vector<16x32xf32>
    %13 = arith.addf %10, %12 : vector<16x32xf32>
    %cst_11 = arith.constant 0.000000e+00 : f32
    %14 = vector.broadcast %cst_11 : f32 to vector<16x32xf32>
    %15 = arith.maximumf %13, %14 : vector<16x32xf32>
    %16 = arith.truncf %15 : vector<16x32xf32> to vector<16x32xbf16>
    %c0_12 = arith.constant 0 : index
    %c0_13 = arith.constant 0 : index
    %17 = vector.load %arg6[%c0_12, %c0_13] : memref<32x16xbf16, #tpu.memory_space<vmem>>, vector<32x16xbf16>
    %cst_14 = arith.constant dense<0.000000e+00> : vector<16x16xf32>
    %18 = tpu.matmul %16, %17, %cst_14 {dimension_numbers = #tpu.dot_dimension_numbers<[1], [0], [0], [1], [0, 0, 1, 1], [], []>} : vector<16x32xbf16>, vector<32x16xbf16>, vector<16x16xf32> -> vector<16x16xf32>
    %c0_15 = arith.constant 0 : index
    %c0_16 = arith.constant 0 : index
    %19 = vector.load %arg7[%c0_15, %c0_16] : memref<1x16xf32, #tpu.memory_space<vmem>>, vector<1x16xf32>
    %20 = vector.broadcast %19 : vector<1x16xf32> to vector<16x16xf32>
    %21 = arith.addf %18, %20 : vector<16x16xf32>
    %c0_17 = arith.constant 0 : index
    %c0_18 = arith.constant 0 : index
    %22 = vector.load %arg8[%c0_17, %c0_18] : memref<16x16xf32, #tpu.memory_space<vmem>>, vector<16x16xf32>
    tpu.vector_store %arg8[%c0_17, %c0_18], %21 {strides = array<i32>} : memref<16x16xf32, #tpu.memory_space<vmem>>, vector<16x16xf32>,
    return
  }
  func.func @transform_0(%arg0: i32) -> (i32, i32) {
    %c0_i32 = arith.constant 0 : i32
    %c0_i32_0 = arith.constant 0 : i32
    return %arg0, %c0_i32 : i32, i32
  }
  func.func @transform_1(%arg0: i32) -> (i32, i32) {
    %c0_i32 = arith.constant 0 : i32
    %c0_i32_0 = arith.constant 0 : i32
    %c0_i32_1 = arith.constant 0 : i32
    return %c0_i32, %c0_i32_0 : i32, i32
  }
  func.func @transform_2(%arg0: i32) -> (i32, i32) {
    %c0_i32 = arith.constant 0 : i32
    %c0_i32_0 = arith.constant 0 : i32
    %c0_i32_1 = arith.constant 0 : i32
    return %c0_i32, %c0_i32_0 : i32, i32
  }
  func.func @transform_3(%arg0: i32) -> (i32, i32) {
    %c0_i32 = arith.constant 0 : i32
    %c0_i32_0 = arith.constant 0 : i32
    %c0_i32_1 = arith.constant 0 : i32
    return %c0_i32, %c0_i32_0 : i32, i32
  }
  func.func @transform_4(%arg0: i32) -> (i32, i32) {
    %c0_i32 = arith.constant 0 : i32
    %c0_i32_0 = arith.constant 0 : i32
    %c0_i32_1 = arith.constant 0 : i32
    return %c0_i32, %c0_i32_0 : i32, i32
  }
  func.func @transform_5(%arg0: i32) -> (i32, i32) {
    %c0_i32 = arith.constant 0 : i32
    %c0_i32_0 = arith.constant 0 : i32
    %c0_i32_1 = arith.constant 0 : i32
    return %c0_i32, %c0_i32_0 : i32, i32
  }
  func.func @transform_6(%arg0: i32) -> (i32, i32) {
    %c0_i32 = arith.constant 0 : i32
    %c0_i32_0 = arith.constant 0 : i32
    %c0_i32_1 = arith.constant 0 : i32
    return %c0_i32, %c0_i32_0 : i32, i32
  }
  func.func @transform_7(%arg0: i32) -> (i32, i32) {
    %c0_i32 = arith.constant 0 : i32
    %c0_i32_0 = arith.constant 0 : i32
    return %arg0, %c0_i32 : i32, i32
  }
}

</mosaic_0001>

<llo_original>
// kernel: tpu_custom_call.1
$region0: #{tpu_custom_call.1}
  #allocation0 [shape = 'u32[]', space=smem, size = 0x4, offset = 0x4, fixed_abs, tag = 'smem constant byte address 0x4 - core index']
  #allocation1 [shape = 'u32[144,128]{1,0:T(1,128)}', space=vmem, size = 0x12000, scoped, tag = 'internal scratch']
  %s0 = inlined_call_operand.vmem [shape: bf16[16,1024], index: 0, kind: input, shape index: {}]
  %s1 = inlined_call_operand.vmem [shape: bf16[1024,32], index: 1, kind: input, shape index: {}]
  %s2 = inlined_call_operand.vmem [shape: f32[1,32], index: 2, kind: input, shape index: {}]
  %s3 = inlined_call_operand.vmem [shape: bf16[32,32], index: 3, kind: input, shape index: {}]
  %s4 = inlined_call_operand.vmem [shape: f32[1,32], index: 4, kind: input, shape index: {}]
  %s5 = inlined_call_operand.vmem [shape: bf16[32,16], index: 5, kind: input, shape index: {}]
  %s6 = inlined_call_operand.vmem [shape: f32[1,16], index: 6, kind: input, shape index: {}]
  %s7 = inlined_call_operand.hbm [shape: f32[16,16], index: 7, kind: output, shape index: {}]
  %s8 = sld [smem:[#allocation0]]
  $region38: #{tpu_custom_call.1} parent=0
    _
  %s10 = ssub.s32 1, %s8
  %s11 = scalar_select 0, %s10, %s8
  $region1: #{tpu_custom_call.1} parent=0
    #allocation2 [shape = 'u8[8192]{0}', space=vmem, size = 0x2000, scoped, tag = 'output window, operand 0, single buffered']
    #allocation3 [shape = 's32[1]{0}', space=sflag, size = 0x4, scoped, tag = 'scoped memory for tpu_custom_call.1']
    %12 = vsyncpa [#allocation3], 0
    // Predicated region
    $region2: #{tpu_custom_call.1} parent=1 // pred_check
      _
    $region3: #{tpu_custom_call.1} parent=1 // pred_check_branch
      %14 = sbr.rel (0) target = $region5
    $region4: #{tpu_custom_call.1} parent=1 // pred_region
      _
    $region5: #{tpu_custom_call.1} parent=1 // pred_fallthru
      _
    // Predicated region
    $region6: #{tpu_custom_call.1} parent=1 // pred_check
      _
    $region7: #{tpu_custom_call.1} parent=1 // pred_check_branch
      %16 = sbr.rel (0) target = $region9
    $region8: #{tpu_custom_call.1} parent=1 // pred_region
      _
    $region9: #{tpu_custom_call.1} parent=1 // pred_fallthru
      _
    // Predicated region
    $region10: #{tpu_custom_call.1} parent=1 // pred_check
      _
    $region11: #{tpu_custom_call.1} parent=1 // pred_check_branch
      %18 = sbr.rel (0) target = $region13
    $region12: #{tpu_custom_call.1} parent=1 // pred_region
      _
    $region13: #{tpu_custom_call.1} parent=1 // pred_fallthru
      _
    // Predicated region
    $region14: #{tpu_custom_call.1} parent=1 // pred_check
      _
    $region15: #{tpu_custom_call.1} parent=1 // pred_check_branch
      %20 = sbr.rel (0) target = $region17
    $region16: #{tpu_custom_call.1} parent=1 // pred_region
      _
    $region17: #{tpu_custom_call.1} parent=1 // pred_fallthru
      _
    // Predicated region
    $region18: #{tpu_custom_call.1} parent=1 // pred_check
      _
    $region19: #{tpu_custom_call.1} parent=1 // pred_check_branch
      %22 = sbr.rel (0) target = $region21
    $region20: #{tpu_custom_call.1} parent=1 // pred_region
      _
    $region21: #{tpu_custom_call.1} parent=1 // pred_fallthru
      _
    // Predicated region
    $region22: #{tpu_custom_call.1} parent=1 // pred_check
      _
    $region23: #{tpu_custom_call.1} parent=1 // pred_check_branch
      %24 = sbr.rel (0) target = $region25
    $region24: #{tpu_custom_call.1} parent=1 // pred_region
      _
    $region25: #{tpu_custom_call.1} parent=1 // pred_fallthru
      _
    // Predicated region
    $region26: #{tpu_custom_call.1} parent=1 // pred_check
      _
    $region27: #{tpu_custom_call.1} parent=1 // pred_check_branch
      %26 = sbr.rel (0) target = $region29
    $region28: #{tpu_custom_call.1} parent=1 // pred_region
      _
    $region29: #{tpu_custom_call.1} parent=1 // pred_fallthru
      _
    %v28 = vld [vmem:[%s0] sm:$0xff]
    %v29 = vld [vmem:[%s0 + $0x8] sm:$0xff]
    %v30 = vld [vmem:[%s0 + $0x10] sm:$0xff]
    %v31 = vld [vmem:[%s0 + $0x18] sm:$0xff]
    %v32 = vld [vmem:[%s0 + $0x20] sm:$0xff]
    %v33 = vld [vmem:[%s0 + $0x28] sm:$0xff]
    %v34 = vld [vmem:[%s0 + $0x30] sm:$0xff]
    %v35 = vld [vmem:[%s0 + $0x38] sm:$0xff]
    %v36 = vld [vmem:[%s1] sm:$0xf]
    %v37 = vld [vmem:[%s1 + $0x4] sm:$0xf]
    %v38 = vld [vmem:[%s1 + $0x8] sm:$0xf]
    %v39 = vld [vmem:[%s1 + $0xc] sm:$0xf]
    %v40 = vld [vmem:[%s1 + $0x10] sm:$0xf]
    %v41 = vld [vmem:[%s1 + $0x14] sm:$0xf]
    %v42 = vld [vmem:[%s1 + $0x18] sm:$0xf]
    %v43 = vld [vmem:[%s1 + $0x1c] sm:$0xf]
    %v44 = vld [vmem:[%s1 + $0x20] sm:$0xf]
    %v45 = vld [vmem:[%s1 + $0x24] sm:$0xf]
    %v46 = vld [vmem:[%s1 + $0x28] sm:$0xf]
    %v47 = vld [vmem:[%s1 + $0x2c] sm:$0xf]
    %v48 = vld [vmem:[%s1 + $0x30] sm:$0xf]
    %v49 = vld [vmem:[%s1 + $0x34] sm:$0xf]
    %v50 = vld [vmem:[%s1 + $0x38] sm:$0xf]
    %v51 = vld [vmem:[%s1 + $0x3c] sm:$0xf]
    %v52 = vld [vmem:[%s1 + $0x40] sm:$0xf]
    %v53 = vld [vmem:[%s1 + $0x44] sm:$0xf]
    %v54 = vld [vmem:[%s1 + $0x48] sm:$0xf]
    %v55 = vld [vmem:[%s1 + $0x4c] sm:$0xf]
    %v56 = vld [vmem:[%s1 + $0x50] sm:$0xf]
    %v57 = vld [vmem:[%s1 + $0x54] sm:$0xf]
    %v58 = vld [vmem:[%s1 + $0x58] sm:$0xf]
    %v59 = vld [vmem:[%s1 + $0x5c] sm:$0xf]
    %v60 = vld [vmem:[%s1 + $0x60] sm:$0xf]
    %v61 = vld [vmem:[%s1 + $0x64] sm:$0xf]
    %v62 = vld [vmem:[%s1 + $0x68] sm:$0xf]
    %v63 = vld [vmem:[%s1 + $0x6c] sm:$0xf]
    %v64 = vld [vmem:[%s1 + $0x70] sm:$0xf]
    %v65 = vld [vmem:[%s1 + $0x74] sm:$0xf]
    %v66 = vld [vmem:[%s1 + $0x78] sm:$0xf]
    %v67 = vld [vmem:[%s1 + $0x7c] sm:$0xf]
    %v68 = vld [vmem:[%s1 + $0x80] sm:$0xf]
    %v69 = vld [vmem:[%s1 + $0x84] sm:$0xf]
    %v70 = vld [vmem:[%s1 + $0x88] sm:$0xf]
    %v71 = vld [vmem:[%s1 + $0x8c] sm:$0xf]
    %v72 = vld [vmem:[%s1 + $0x90] sm:$0xf]
    %v73 = vld [vmem:[%s1 + $0x94] sm:$0xf]
    %v74 = vld [vmem:[%s1 + $0x98] sm:$0xf]
    %v75 = vld [vmem:[%s1 + $0x9c] sm:$0xf]
    %v76 = vld [vmem:[%s1 + $0xa0] sm:$0xf]
    %v77 = vld [vmem:[%s1 + $0xa4] sm:$0xf]
    %v78 = vld [vmem:[%s1 + $0xa8] sm:$0xf]
    %v79 = vld [vmem:[%s1 + $0xac] sm:$0xf]
    %v80 = vld [vmem:[%s1 + $0xb0] sm:$0xf]
    %v81 = vld [vmem:[%s1 + $0xb4] sm:$0xf]
    %v82 = vld [vmem:[%s1 + $0xb8] sm:$0xf]
    %v83 = vld [vmem:[%s1 + $0xbc] sm:$0xf]
    %v84 = vld [vmem:[%s1 + $0xc0] sm:$0xf]
    %v85 = vld [vmem:[%s1 + $0xc4] sm:$0xf]
    %v86 = vld [vmem:[%s1 + $0xc8] sm:$0xf]
    %v87 = vld [vmem:[%s1 + $0xcc] sm:$0xf]
    %v88 = vld [vmem:[%s1 + $0xd0] sm:$0xf]
    %v89 = vld [vmem:[%s1 + $0xd4] sm:$0xf]
    %v90 = vld [vmem:[%s1 + $0xd8] sm:$0xf]
    %v91 = vld [vmem:[%s1 + $0xdc] sm:$0xf]
    %v92 = vld [vmem:[%s1 + $0xe0] sm:$0xf]
    %v93 = vld [vmem:[%s1 + $0xe4] sm:$0xf]
    %v94 = vld [vmem:[%s1 + $0xe8] sm:$0xf]
    %v95 = vld [vmem:[%s1 + $0xec] sm:$0xf]
    %v96 = vld [vmem:[%s1 + $0xf0] sm:$0xf]
    %v97 = vld [vmem:[%s1 + $0xf4] sm:$0xf]
    %v98 = vld [vmem:[%s1 + $0xf8] sm:$0xf]
    %v99 = vld [vmem:[%s1 + $0xfc] sm:$0xf]
    %v100 = vld [vmem:[%s1 + $0x100] sm:$0xf]
    %v101 = vld [vmem:[%s1 + $0x104] sm:$0xf]
    %v102 = vld [vmem:[%s1 + $0x108] sm:$0xf]
    %v103 = vld [vmem:[%s1 + $0x10c] sm:$0xf]
    %v104 = vld [vmem:[%s1 + $0x110] sm:$0xf]
    %v105 = vld [vmem:[%s1 + $0x114] sm:$0xf]
    %v106 = vld [vmem:[%s1 + $0x118] sm:$0xf]
    %v107 = vld [vmem:[%s1 + $0x11c] sm:$0xf]
    %v108 = vld [vmem:[%s1 + $0x120] sm:$0xf]
    %v109 = vld [vmem:[%s1 + $0x124] sm:$0xf]
    %v110 = vld [vmem:[%s1 + $0x128] sm:$0xf]
    %v111 = vld [vmem:[%s1 + $0x12c] sm:$0xf]
    %v112 = vld [vmem:[%s1 + $0x130] sm:$0xf]
    %v113 = vld [vmem:[%s1 + $0x134] sm:$0xf]
    %v114 = vld [vmem:[%s1 + $0x138] sm:$0xf]
    %v115 = vld [vmem:[%s1 + $0x13c] sm:$0xf]
    %v116 = vld [vmem:[%s1 + $0x140] sm:$0xf]
    %v117 = vld [vmem:[%s1 + $0x144] sm:$0xf]
    %v118 = vld [vmem:[%s1 + $0x148] sm:$0xf]
    %v119 = vld [vmem:[%s1 + $0x14c] sm:$0xf]
    %v120 = vld [vmem:[%s1 + $0x150] sm:$0xf]
    %v121 = vld [vmem:[%s1 + $0x154] sm:$0xf]
    %v122 = vld [vmem:[%s1 + $0x158] sm:$0xf]
    %v123 = vld [vmem:[%s1 + $0x15c] sm:$0xf]
    %v124 = vld [vmem:[%s1 + $0x160] sm:$0xf]
    %v125 = vld [vmem:[%s1 + $0x164] sm:$0xf]
    %v126 = vld [vmem:[%s1 + $0x168] sm:$0xf]
    %v127 = vld [vmem:[%s1 + $0x16c] sm:$0xf]
    %v128 = vld [vmem:[%s1 + $0x170] sm:$0xf]
    %v129 = vld [vmem:[%s1 + $0x174] sm:$0xf]
    %v130 = vld [vmem:[%s1 + $0x178] sm:$0xf]
    %v131 = vld [vmem:[%s1 + $0x17c] sm:$0xf]
    %v132 = vld [vmem:[%s1 + $0x180] sm:$0xf]
    %v133 = vld [vmem:[%s1 + $0x184] sm:$0xf]
    %v134 = vld [vmem:[%s1 + $0x188] sm:$0xf]
    %v135 = vld [vmem:[%s1 + $0x18c] sm:$0xf]
    %v136 = vld [vmem:[%s1 + $0x190] sm:$0xf]
    %v137 = vld [vmem:[%s1 + $0x194] sm:$0xf]
    %v138 = vld [vmem:[%s1 + $0x198] sm:$0xf]
    %v139 = vld [vmem:[%s1 + $0x19c] sm:$0xf]
    %v140 = vld [vmem:[%s1 + $0x1a0] sm:$0xf]
    %v141 = vld [vmem:[%s1 + $0x1a4] sm:$0xf]
    %v142 = vld [vmem:[%s1 + $0x1a8] sm:$0xf]
    %v143 = vld [vmem:[%s1 + $0x1ac] sm:$0xf]
    %v144 = vld [vmem:[%s1 + $0x1b0] sm:$0xf]
    %v145 = vld [vmem:[%s1 + $0x1b4] sm:$0xf]
    %v146 = vld [vmem:[%s1 + $0x1b8] sm:$0xf]
    %v147 = vld [vmem:[%s1 + $0x1bc] sm:$0xf]
    %v148 = vld [vmem:[%s1 + $0x1c0] sm:$0xf]
    %v149 = vld [vmem:[%s1 + $0x1c4] sm:$0xf]
    %v150 = vld [vmem:[%s1 + $0x1c8] sm:$0xf]
    %v151 = vld [vmem:[%s1 + $0x1cc] sm:$0xf]
    %v152 = vld [vmem:[%s1 + $0x1d0] sm:$0xf]
    %v153 = vld [vmem:[%s1 + $0x1d4] sm:$0xf]
    %v154 = vld [vmem:[%s1 + $0x1d8] sm:$0xf]
    %v155 = vld [vmem:[%s1 + $0x1dc] sm:$0xf]
    %v156 = vld [vmem:[%s1 + $0x1e0] sm:$0xf]
    %v157 = vld [vmem:[%s1 + $0x1e4] sm:$0xf]
    %v158 = vld [vmem:[%s1 + $0x1e8] sm:$0xf]
    %v159 = vld [vmem:[%s1 + $0x1ec] sm:$0xf]
    %v160 = vld [vmem:[%s1 + $0x1f0] sm:$0xf]
    %v161 = vld [vmem:[%s1 + $0x1f4] sm:$0xf]
    %v162 = vld [vmem:[%s1 + $0x1f8] sm:$0xf]
    %v163 = vld [vmem:[%s1 + $0x1fc] sm:$0xf]
    %v164 = vld [vmem:[%s2] sm:$0x1]
    %v166 = vlaneseq
    %v167 = vshrl.u32 %v166, 7
    %v168 = vsub.s32 0, %v167
    %v169 = vrot.slane %v164, %v168
    %v179 = vunpack.c.l.b16 %v28
    %v180 = vunpack.c.h.b16 %v28
    %v181 = vunpack.c.l.b16 %v29
    %v182 = vunpack.c.h.b16 %v29
    %v183 = vunpack.c.l.b16 %v30
    %v184 = vunpack.c.h.b16 %v30
    %v185 = vunpack.c.l.b16 %v31
    %v186 = vunpack.c.h.b16 %v31
    %v187 = vunpack.c.l.b16 %v32
    %v188 = vunpack.c.h.b16 %v32
    %v189 = vunpack.c.l.b16 %v33
    %v190 = vunpack.c.h.b16 %v33
    %v191 = vunpack.c.l.b16 %v34
    %v192 = vunpack.c.h.b16 %v34
    %v193 = vunpack.c.l.b16 %v35
    %v194 = vunpack.c.h.b16 %v35
    %v195 = vpack.c.b16 %v187, %v179
    %v196 = vpack.c.b16 %v188, %v180
    %v197 = vpack.c.b16 %v189, %v181
    %v198 = vpack.c.b16 %v190, %v182
    %v199 = vpack.c.b16 %v191, %v183
    %v200 = vpack.c.b16 %v192, %v184
    %v201 = vpack.c.b16 %v193, %v185
    %v202 = vpack.c.b16 %v194, %v186
    %v339 = vunpack.c.l.b16 %v36
    %v340 = vunpack.c.l.b16 %v37
    %v341 = vunpack.c.l.b16 %v38
    %v342 = vunpack.c.l.b16 %v39
    %v343 = vunpack.c.l.b16 %v40
    %v344 = vunpack.c.l.b16 %v41
    %v345 = vunpack.c.l.b16 %v42
    %v346 = vunpack.c.l.b16 %v43
    %v347 = vunpack.c.l.b16 %v44
    %v348 = vunpack.c.l.b16 %v45
    %v349 = vunpack.c.l.b16 %v46
    %v350 = vunpack.c.l.b16 %v47
    %v351 = vunpack.c.l.b16 %v48
    %v352 = vunpack.c.l.b16 %v49
    %v353 = vunpack.c.l.b16 %v50
    %v354 = vunpack.c.l.b16 %v51
    %v355 = vunpack.c.l.b16 %v52
    %v356 = vunpack.c.l.b16 %v53
    %v357 = vunpack.c.l.b16 %v54
    %v358 = vunpack.c.l.b16 %v55
    %v359 = vunpack.c.l.b16 %v56
    %v360 = vunpack.c.l.b16 %v57
    %v361 = vunpack.c.l.b16 %v58
    %v362 = vunpack.c.l.b16 %v59
    %v363 = vunpack.c.l.b16 %v60
    %v364 = vunpack.c.l.b16 %v61
    %v365 = vunpack.c.l.b16 %v62
    %v366 = vunpack.c.l.b16 %v63
    %v367 = vunpack.c.l.b16 %v64
    %v368 = vunpack.c.l.b16 %v65
    %v369 = vunpack.c.l.b16 %v66
    %v370 = vunpack.c.l.b16 %v67
    %v371 = vunpack.c.l.b16 %v68
    %v372 = vunpack.c.l.b16 %v69
    %v373 = vunpack.c.l.b16 %v70
    %v374 = vunpack.c.l.b16 %v71
    %v375 = vunpack.c.l.b16 %v72
    %v376 = vunpack.c.l.b16 %v73
    %v377 = vunpack.c.l.b16 %v74
    %v378 = vunpack.c.l.b16 %v75
    %v379 = vunpack.c.l.b16 %v76
    %v380 = vunpack.c.l.b16 %v77
    %v381 = vunpack.c.l.b16 %v78
    %v382 = vunpack.c.l.b16 %v79
    %v383 = vunpack.c.l.b16 %v80
    %v384 = vunpack.c.l.b16 %v81
    %v385 = vunpack.c.l.b16 %v82
    %v386 = vunpack.c.l.b16 %v83
    %v387 = vunpack.c.l.b16 %v84
    %v388 = vunpack.c.l.b16 %v85
    %v389 = vunpack.c.l.b16 %v86
    %v390 = vunpack.c.l.b16 %v87
    %v391 = vunpack.c.l.b16 %v88
    %v392 = vunpack.c.l.b16 %v89
    %v393 = vunpack.c.l.b16 %v90
    %v394 = vunpack.c.l.b16 %v91
    %v395 = vunpack.c.l.b16 %v92
    %v396 = vunpack.c.l.b16 %v93
    %v397 = vunpack.c.l.b16 %v94
    %v398 = vunpack.c.l.b16 %v95
    %v399 = vunpack.c.l.b16 %v96
    %v400 = vunpack.c.l.b16 %v97
    %v401 = vunpack.c.l.b16 %v98
    %v402 = vunpack.c.l.b16 %v99
    %v403 = vunpack.c.l.b16 %v100
    %v404 = vunpack.c.l.b16 %v101
    %v405 = vunpack.c.l.b16 %v102
    %v406 = vunpack.c.l.b16 %v103
    %v407 = vunpack.c.l.b16 %v104
    %v408 = vunpack.c.l.b16 %v105
    %v409 = vunpack.c.l.b16 %v106
    %v410 = vunpack.c.l.b16 %v107
    %v411 = vunpack.c.l.b16 %v108
    %v412 = vunpack.c.l.b16 %v109
    %v413 = vunpack.c.l.b16 %v110
    %v414 = vunpack.c.l.b16 %v111
    %v415 = vunpack.c.l.b16 %v112
    %v416 = vunpack.c.l.b16 %v113
    %v417 = vunpack.c.l.b16 %v114
    %v418 = vunpack.c.l.b16 %v115
    %v419 = vunpack.c.l.b16 %v116
    %v420 = vunpack.c.l.b16 %v117
    %v421 = vunpack.c.l.b16 %v118
    %v422 = vunpack.c.l.b16 %v119
    %v423 = vunpack.c.l.b16 %v120
    %v424 = vunpack.c.l.b16 %v121
    %v425 = vunpack.c.l.b16 %v122
    %v426 = vunpack.c.l.b16 %v123
    %v427 = vunpack.c.l.b16 %v124
    %v428 = vunpack.c.l.b16 %v125
    %v429 = vunpack.c.l.b16 %v126
    %v430 = vunpack.c.l.b16 %v127
    %v431 = vunpack.c.l.b16 %v128
    %v432 = vunpack.c.l.b16 %v129
    %v433 = vunpack.c.l.b16 %v130
    %v434 = vunpack.c.l.b16 %v131
    %v435 = vunpack.c.l.b16 %v132
    %v436 = vunpack.c.l.b16 %v133
    %v437 = vunpack.c.l.b16 %v134
    %v438 = vunpack.c.l.b16 %v135
    %v439 = vunpack.c.l.b16 %v136
    %v440 = vunpack.c.l.b16 %v137
    %v441 = vunpack.c.l.b16 %v138
    %v442 = vunpack.c.l.b16 %v139
    %v443 = vunpack.c.l.b16 %v140
    %v444 = vunpack.c.l.b16 %v141
    %v445 = vunpack.c.l.b16 %v142
    %v446 = vunpack.c.l.b16 %v143
    %v447 = vunpack.c.l.b16 %v144
    %v448 = vunpack.c.l.b16 %v145
    %v449 = vunpack.c.l.b16 %v146
    %v450 = vunpack.c.l.b16 %v147
    %v451 = vunpack.c.l.b16 %v148
    %v452 = vunpack.c.l.b16 %v149
    %v453 = vunpack.c.l.b16 %v150
    %v454 = vunpack.c.l.b16 %v151
    %v455 = vunpack.c.l.b16 %v152
    %v456 = vunpack.c.l.b16 %v153
    %v457 = vunpack.c.l.b16 %v154
    %v458 = vunpack.c.l.b16 %v155
    %v459 = vunpack.c.l.b16 %v156
    %v460 = vunpack.c.l.b16 %v157
    %v461 = vunpack.c.l.b16 %v158
    %v462 = vunpack.c.l.b16 %v159
    %v463 = vunpack.c.l.b16 %v160
    %v464 = vunpack.c.l.b16 %v161
    %v465 = vunpack.c.l.b16 %v162
    %v466 = vunpack.c.l.b16 %v163
    %v467 = vpack.c.b16 %v340, %v339
    %v468 = vpack.c.b16 %v342, %v341
    %v469 = vpack.c.b16 %v344, %v343
    %v470 = vpack.c.b16 %v346, %v345
    %v471 = vpack.c.b16 %v348, %v347
    %v472 = vpack.c.b16 %v350, %v349
    %v473 = vpack.c.b16 %v352, %v351
    %v474 = vpack.c.b16 %v354, %v353
    %v475 = vpack.c.b16 %v356, %v355
    %v476 = vpack.c.b16 %v358, %v357
    %v477 = vpack.c.b16 %v360, %v359
    %v478 = vpack.c.b16 %v362, %v361
    %v479 = vpack.c.b16 %v364, %v363
    %v480 = vpack.c.b16 %v366, %v365
    %v481 = vpack.c.b16 %v368, %v367
    %v482 = vpack.c.b16 %v370, %v369
    %v483 = vpack.c.b16 %v372, %v371
    %v484 = vpack.c.b16 %v374, %v373
    %v485 = vpack.c.b16 %v376, %v375
    %v486 = vpack.c.b16 %v378, %v377
    %v487 = vpack.c.b16 %v380, %v379
    %v488 = vpack.c.b16 %v382, %v381
    %v489 = vpack.c.b16 %v384, %v383
    %v490 = vpack.c.b16 %v386, %v385
    %v491 = vpack.c.b16 %v388, %v387
    %v492 = vpack.c.b16 %v390, %v389
    %v493 = vpack.c.b16 %v392, %v391
    %v494 = vpack.c.b16 %v394, %v393
    %v495 = vpack.c.b16 %v396, %v395
    %v496 = vpack.c.b16 %v398, %v397
    %v497 = vpack.c.b16 %v400, %v399
    %v498 = vpack.c.b16 %v402, %v401
    %v499 = vpack.c.b16 %v404, %v403
    %v500 = vpack.c.b16 %v406, %v405
    %v501 = vpack.c.b16 %v408, %v407
    %v502 = vpack.c.b16 %v410, %v409
    %v503 = vpack.c.b16 %v412, %v411
    %v504 = vpack.c.b16 %v414, %v413
    %v505 = vpack.c.b16 %v416, %v415
    %v506 = vpack.c.b16 %v418, %v417
    %v507 = vpack.c.b16 %v420, %v419
    %v508 = vpack.c.b16 %v422, %v421
    %v509 = vpack.c.b16 %v424, %v423
    %v510 = vpack.c.b16 %v426, %v425
    %v511 = vpack.c.b16 %v428, %v427
    %v512 = vpack.c.b16 %v430, %v429
    %v513 = vpack.c.b16 %v432, %v431
    %v514 = vpack.c.b16 %v434, %v433
    %v515 = vpack.c.b16 %v436, %v435
    %v516 = vpack.c.b16 %v438, %v437
    %v517 = vpack.c.b16 %v440, %v439
    %v518 = vpack.c.b16 %v442, %v441
    %v519 = vpack.c.b16 %v444, %v443
    %v520 = vpack.c.b16 %v446, %v445
    %v521 = vpack.c.b16 %v448, %v447
    %v522 = vpack.c.b16 %v450, %v449
    %v523 = vpack.c.b16 %v452, %v451
    %v524 = vpack.c.b16 %v454, %v453
    %v525 = vpack.c.b16 %v456, %v455
    %v526 = vpack.c.b16 %v458, %v457
    %v527 = vpack.c.b16 %v460, %v459
    %v528 = vpack.c.b16 %v462, %v461
    %v529 = vpack.c.b16 %v464, %v463
    %v530 = vpack.c.b16 %v466, %v465
    %595 = vmatprep.subr.bf16.mxu0 0
    %596 = vmatpush1.bf16.msra.mxu0 %v474
    %597 = vmatprep.subr.bf16.mxu0 0
    %598 = vmatpush1.bf16.msra.mxu0 %v473
    %599 = vmatprep.subr.bf16.mxu0 0
    %600 = vmatpush1.bf16.msra.mxu0 %v472
    %601 = vmatprep.subr.bf16.mxu0 0
    %602 = vmatpush1.bf16.msra.mxu0 %v471
    %603 = vmatprep.subr.bf16.mxu0 0
    %604 = vmatpush1.bf16.msra.mxu0 %v470
    %605 = vmatprep.subr.bf16.mxu0 0
    %606 = vmatpush1.bf16.msra.mxu0 %v469
    %607 = vmatprep.subr.bf16.mxu0 0
    %608 = vmatpush1.bf16.msra.mxu0 %v468
    %609 = vmatprep.subr.bf16.mxu0 0
    %610 = vmatpush1.bf16.msra.mxu0 %v467
    %611 = vmatprep.subr.bf16.mxu0 0
    %612 = vmatpush2.bf16.msra.mxu0 %v482
    %613 = vmatprep.subr.bf16.mxu0 0
    %614 = vmatpush2.bf16.msra.mxu0 %v481
    %615 = vmatprep.subr.bf16.mxu0 0
    %616 = vmatpush2.bf16.msra.mxu0 %v480
    %617 = vmatprep.subr.bf16.mxu0 0
    %618 = vmatpush2.bf16.msra.mxu0 %v479
    %619 = vmatprep.subr.bf16.mxu0 0
    %620 = vmatpush2.bf16.msra.mxu0 %v478
    %621 = vmatprep.subr.bf16.mxu0 0
    %622 = vmatpush2.bf16.msra.mxu0 %v477
    %623 = vmatprep.subr.bf16.mxu0 0
    %624 = vmatpush2.bf16.msra.mxu0 %v476
    %625 = vmatprep.subr.bf16.mxu0 0
    %626 = vmatpush2.bf16.msra.mxu0 %v475
    %627 = vmatprep.mubr.bf16.mxu0 %v196
    %628 = vmatmul.mubr.bf16.gmra.mxu0 %v195
    %v629 = vpop.f32.mrf.mxu0
    %v630 = vadd.f32 %v169, %v629
    %v631 = vpop.f32.mrf.mxu0
    %v632 = vpop.f32.mrf.mxu0
    %v633 = vadd.f32 %v169, %v632
    %v634 = vpop.f32.mrf.mxu0
    %635 = vdwg.mxu0
    %636 = vmatprep.subr.bf16.mxu0 0
    %637 = vmatpush1.bf16.msra.mxu0 %v490
    %638 = vmatprep.subr.bf16.mxu0 0
    %639 = vmatpush1.bf16.msra.mxu0 %v489
    %640 = vmatprep.subr.bf16.mxu0 0
    %641 = vmatpush1.bf16.msra.mxu0 %v488
    %642 = vmatprep.subr.bf16.mxu0 0
    %643 = vmatpush1.bf16.msra.mxu0 %v487
    %644 = vmatprep.subr.bf16.mxu0 0
    %645 = vmatpush1.bf16.msra.mxu0 %v486
    %646 = vmatprep.subr.bf16.mxu0 0
    %647 = vmatpush1.bf16.msra.mxu0 %v485
    %648 = vmatprep.subr.bf16.mxu0 0
    %649 = vmatpush1.bf16.msra.mxu0 %v484
    %650 = vmatprep.subr.bf16.mxu0 0
    %651 = vmatpush1.bf16.msra.mxu0 %v483
    %652 = vmatprep.subr.bf16.mxu0 0
    %653 = vmatpush2.bf16.msra.mxu0 %v498
    %654 = vmatprep.subr.bf16.mxu0 0
    %655 = vmatpush2.bf16.msra.mxu0 %v497
    %656 = vmatprep.subr.bf16.mxu0 0
    %657 = vmatpush2.bf16.msra.mxu0 %v496
    %658 = vmatprep.subr.bf16.mxu0 0
    %659 = vmatpush2.bf16.msra.mxu0 %v495
    %660 = vmatprep.subr.bf16.mxu0 0
    %661 = vmatpush2.bf16.msra.mxu0 %v494
    %662 = vmatprep.subr.bf16.mxu0 0
    %663 = vmatpush2.bf16.msra.mxu0 %v493
    %664 = vmatprep.subr.bf16.mxu0 0
    %665 = vmatpush2.bf16.msra.mxu0 %v492
    %666 = vmatprep.subr.bf16.mxu0 0
    %667 = vmatpush2.bf16.msra.mxu0 %v491
    %668 = vmatprep.mubr.bf16.mxu0 %v198
    %669 = vmatmul.mubr.bf16.gmra.mxu0 %v197
    %v670 = vpop.f32.mrf.mxu0
    %v671 = vadd.f32 %v630, %v670
    %v672 = vpop.f32.mrf.mxu0
    %v673 = vpop.f32.mrf.mxu0
    %v674 = vadd.f32 %v633, %v673
    %v675 = vpop.f32.mrf.mxu0
    %676 = vdwg.mxu0
    %677 = vmatprep.subr.bf16.mxu0 0
    %678 = vmatpush1.bf16.msra.mxu0 %v506
    %679 = vmatprep.subr.bf16.mxu0 0
    %680 = vmatpush1.bf16.msra.mxu0 %v505
    %681 = vmatprep.subr.bf16.mxu0 0
    %682 = vmatpush1.bf16.msra.mxu0 %v504
    %683 = vmatprep.subr.bf16.mxu0 0
    %684 = vmatpush1.bf16.msra.mxu0 %v503
    %685 = vmatprep.subr.bf16.mxu0 0
    %686 = vmatpush1.bf16.msra.mxu0 %v502
    %687 = vmatprep.subr.bf16.mxu0 0
    %688 = vmatpush1.bf16.msra.mxu0 %v501
    %689 = vmatprep.subr.bf16.mxu0 0
    %690 = vmatpush1.bf16.msra.mxu0 %v500
    %691 = vmatprep.subr.bf16.mxu0 0
    %692 = vmatpush1.bf16.msra.mxu0 %v499
    %693 = vmatprep.subr.bf16.mxu0 0
    %694 = vmatpush2.bf16.msra.mxu0 %v514
    %695 = vmatprep.subr.bf16.mxu0 0
    %696 = vmatpush2.bf16.msra.mxu0 %v513
    %697 = vmatprep.subr.bf16.mxu0 0
    %698 = vmatpush2.bf16.msra.mxu0 %v512
    %699 = vmatprep.subr.bf16.mxu0 0
    %700 = vmatpush2.bf16.msra.mxu0 %v511
    %701 = vmatprep.subr.bf16.mxu0 0
    %702 = vmatpush2.bf16.msra.mxu0 %v510
    %703 = vmatprep.subr.bf16.mxu0 0
    %704 = vmatpush2.bf16.msra.mxu0 %v509
    %705 = vmatprep.subr.bf16.mxu0 0
    %706 = vmatpush2.bf16.msra.mxu0 %v508
    %707 = vmatprep.subr.bf16.mxu0 0
    %708 = vmatpush2.bf16.msra.mxu0 %v507
    %709 = vmatprep.mubr.bf16.mxu0 %v200
    %710 = vmatmul.mubr.bf16.gmra.mxu0 %v199
    %v711 = vpop.f32.mrf.mxu0
    %v712 = vadd.f32 %v671, %v711
    %v713 = vpop.f32.mrf.mxu0
    %v714 = vpop.f32.mrf.mxu0
    %v715 = vadd.f32 %v674, %v714
    %v716 = vpop.f32.mrf.mxu0
    %717 = vdwg.mxu0
    %718 = vmatprep.subr.bf16.mxu0 0
    %719 = vmatpush1.bf16.msra.mxu0 %v522
    %720 = vmatprep.subr.bf16.mxu0 0
    %721 = vmatpush1.bf16.msra.mxu0 %v521
    %722 = vmatprep.subr.bf16.mxu0 0
    %723 = vmatpush1.bf16.msra.mxu0 %v520
    %724 = vmatprep.subr.bf16.mxu0 0
    %725 = vmatpush1.bf16.msra.mxu0 %v519
    %726 = vmatprep.subr.bf16.mxu0 0
    %727 = vmatpush1.bf16.msra.mxu0 %v518
    %728 = vmatprep.subr.bf16.mxu0 0
    %729 = vmatpush1.bf16.msra.mxu0 %v517
    %730 = vmatprep.subr.bf16.mxu0 0
    %731 = vmatpush1.bf16.msra.mxu0 %v516
    %732 = vmatprep.subr.bf16.mxu0 0
    %733 = vmatpush1.bf16.msra.mxu0 %v515
    %734 = vmatprep.subr.bf16.mxu0 0
    %735 = vmatpush2.bf16.msra.mxu0 %v530
    %736 = vmatprep.subr.bf16.mxu0 0
    %737 = vmatpush2.bf16.msra.mxu0 %v529
    %738 = vmatprep.subr.bf16.mxu0 0
    %739 = vmatpush2.bf16.msra.mxu0 %v528
    %740 = vmatprep.subr.bf16.mxu0 0
    %741 = vmatpush2.bf16.msra.mxu0 %v527
    %742 = vmatprep.subr.bf16.mxu0 0
    %743 = vmatpush2.bf16.msra.mxu0 %v526
    %744 = vmatprep.subr.bf16.mxu0 0
    %745 = vmatpush2.bf16.msra.mxu0 %v525
    %746 = vmatprep.subr.bf16.mxu0 0
    %747 = vmatpush2.bf16.msra.mxu0 %v524
    %748 = vmatprep.subr.bf16.mxu0 0
    %749 = vmatpush2.bf16.msra.mxu0 %v523
    %750 = vmatprep.mubr.bf16.mxu0 %v202
    %751 = vmatmul.mubr.bf16.gmra.mxu0 %v201
    %v752 = vpop.f32.mrf.mxu0
    %v753 = vadd.f32 %v712, %v752
    %v754 = vpop.f32.mrf.mxu0
    %v755 = vpop.f32.mrf.mxu0
    %v756 = vadd.f32 %v715, %v755
    %v757 = vpop.f32.mrf.mxu0
    %758 = vdwg.mxu0
    %v759 = vmax.f32 %v753, 0.0
    %v760 = vmax.f32 %v756, 0.0
    %v761 = vpack.c.bf16 %v760, %v759
    %v762 = vld [vmem:[%s3] sm:$0xf]
    %v763 = vld [vmem:[%s3 + $0x4] sm:$0xf]
    %v764 = vld [vmem:[%s3 + $0x8] sm:$0xf]
    %v765 = vld [vmem:[%s3 + $0xc] sm:$0xf]
    %v766 = vld [vmem:[%s4] sm:$0x1]
    %v768 = vlaneseq
    %v769 = vshrl.u32 %v768, 7
    %v770 = vsub.s32 0, %v769
    %v771 = vrot.slane %v766, %v770
    %v777 = vunpack.c.l.b16 %v762
    %v778 = vunpack.c.l.b16 %v763
    %v779 = vunpack.c.l.b16 %v764
    %v780 = vunpack.c.l.b16 %v765
    %v781 = vpack.c.b16 %v778, %v777
    %v782 = vpack.c.b16 %v780, %v779
    %vm785 = vcmask 261120
    %v787 = vsel %vm785, %v761, 0
    %789 = vmatprep.subr.bf16.mxu0 0
    %790 = vmatpush1.bf16.msra.mxu0 0
    %791 = vmatprep.subr.bf16.mxu0 0
    %792 = vmatpush1.bf16.msra.mxu0 0
    %793 = vmatprep.subr.bf16.mxu0 0
    %794 = vmatpush1.bf16.msra.mxu0 0
    %795 = vmatprep.subr.bf16.mxu0 0
    %796 = vmatpush1.bf16.msra.mxu0 0
    %797 = vmatprep.subr.bf16.mxu0 0
    %798 = vmatpush1.bf16.msra.mxu0 0
    %799 = vmatprep.subr.bf16.mxu0 0
    %800 = vmatpush1.bf16.msra.mxu0 0
    %801 = vmatprep.subr.bf16.mxu0 0
    %802 = vmatpush1.bf16.msra.mxu0 %v782
    %803 = vmatprep.subr.bf16.mxu0 0
    %804 = vmatpush1.bf16.msra.mxu0 %v781
    %805 = vmatprep.subr.bf16.mxu0 0
    %806 = vmatpush2.bf16.msra.mxu0 0
    %807 = vmatprep.subr.bf16.mxu0 0
    %808 = vmatpush2.bf16.msra.mxu0 0
    %809 = vmatprep.subr.bf16.mxu0 0
    %810 = vmatpush2.bf16.msra.mxu0 0
    %811 = vmatprep.subr.bf16.mxu0 0
    %812 = vmatpush2.bf16.msra.mxu0 0
    %813 = vmatprep.subr.bf16.mxu0 0
    %814 = vmatpush2.bf16.msra.mxu0 0
    %815 = vmatprep.subr.bf16.mxu0 0
    %816 = vmatpush2.bf16.msra.mxu0 0
    %817 = vmatprep.subr.bf16.mxu0 0
    %818 = vmatpush2.bf16.msra.mxu0 0
    %819 = vmatprep.subr.bf16.mxu0 0
    %820 = vmatpush2.bf16.msra.mxu0 0
    %821 = vmatprep.mubr.bf16.mxu0 0
    %822 = vmatmul.mubr.bf16.gmra.mxu0 %v787
    %v823 = vpop.f32.mrf.mxu0
    %v824 = vadd.f32 %v771, %v823
    %v825 = vpop.f32.mrf.mxu0
    %v826 = vpop.f32.mrf.mxu0
    %v827 = vadd.f32 %v771, %v826
    %v828 = vpop.f32.mrf.mxu0
    %829 = vdwg.mxu0
    %v830 = vmax.f32 %v824, 0.0
    %v831 = vmax.f32 %v827, 0.0
    %v832 = vpack.c.bf16 %v831, %v830
    %v833 = vld [vmem:[%s5] sm:$0xf]
    %v834 = vld [vmem:[%s5 + $0x4] sm:$0xf]
    %v835 = vld [vmem:[%s5 + $0x8] sm:$0xf]
    %v836 = vld [vmem:[%s5 + $0xc] sm:$0xf]
    %v837 = vld [vmem:[%s6] sm:$0x1]
    %v839 = vlaneseq
    %v840 = vshrl.u32 %v839, 7
    %v841 = vsub.s32 0, %v840
    %v842 = vrot.slane %v837, %v841
    %v848 = vunpack.c.l.b16 %v833
    %v849 = vunpack.c.l.b16 %v834
    %v850 = vunpack.c.l.b16 %v835
    %v851 = vunpack.c.l.b16 %v836
    %v852 = vpack.c.b16 %v849, %v848
    %v853 = vpack.c.b16 %v851, %v850
    %v857 = vsel %vm785, %v832, 0
    %859 = vmatprep.subr.bf16.mxu0 0
    %860 = vmatpush1.bf16.msra.mxu0 0
    %861 = vmatprep.subr.bf16.mxu0 0
    %862 = vmatpush1.bf16.msra.mxu0 0
    %863 = vmatprep.subr.bf16.mxu0 0
    %864 = vmatpush1.bf16.msra.mxu0 0
    %865 = vmatprep.subr.bf16.mxu0 0
    %866 = vmatpush1.bf16.msra.mxu0 0
    %867 = vmatprep.subr.bf16.mxu0 0
    %868 = vmatpush1.bf16.msra.mxu0 0
    %869 = vmatprep.subr.bf16.mxu0 0
    %870 = vmatpush1.bf16.msra.mxu0 0
    %871 = vmatprep.subr.bf16.mxu0 0
    %872 = vmatpush1.bf16.msra.mxu0 %v853
    %873 = vmatprep.subr.bf16.mxu0 0
    %874 = vmatpush1.bf16.msra.mxu0 %v852
    %875 = vmatprep.subr.bf16.mxu0 0
    %876 = vmatpush2.bf16.msra.mxu0 0
    %877 = vmatprep.subr.bf16.mxu0 0
    %878 = vmatpush2.bf16.msra.mxu0 0
    %879 = vmatprep.subr.bf16.mxu0 0
    %880 = vmatpush2.bf16.msra.mxu0 0
    %881 = vmatprep.subr.bf16.mxu0 0
    %882 = vmatpush2.bf16.msra.mxu0 0
    %883 = vmatprep.subr.bf16.mxu0 0
    %884 = vmatpush2.bf16.msra.mxu0 0
    %885 = vmatprep.subr.bf16.mxu0 0
    %886 = vmatpush2.bf16.msra.mxu0 0
    %887 = vmatprep.subr.bf16.mxu0 0
    %888 = vmatpush2.bf16.msra.mxu0 0
    %889 = vmatprep.subr.bf16.mxu0 0
    %890 = vmatpush2.bf16.msra.mxu0 0
    %891 = vmatprep.mubr.bf16.mxu0 0
    %892 = vmatmul.mubr.bf16.gmra.mxu0 %v857
    %v893 = vpop.f32.mrf.mxu0
    %v894 = vadd.f32 %v842, %v893
    %v895 = vpop.f32.mrf.mxu0
    %v896 = vpop.f32.mrf.mxu0
    %v897 = vadd.f32 %v842, %v896
    %v898 = vpop.f32.mrf.mxu0
    %899 = vdwg.mxu0
    %vm900 = vcmask 130048
    %901 = vst.msk [vmem:[#allocation2] sm:$0xff] %vm900, %v894
    %902 = vst.msk [vmem:[#allocation2 + $0x8] sm:$0xff] %vm900, %v897
    // Predicated region
    $region30: #{tpu_custom_call.1} parent=1 // pred_check
      _
    $region31: #{tpu_custom_call.1} parent=1 // pred_check_branch
      %904 = sbr.rel (0) target = $region33
    $region32: #{tpu_custom_call.1} parent=1 // pred_region
      %s906 = ssub.s32 256, 256
      %907 = vsyncadd [#allocation3], %s906
      %s908 = sshll.u32 [#allocation2], 4
      %s909 = int_to_ptr.vmem [resolvable:$true] %s908
      %914 = dma.vmem_to_hbm [thread:$0]  %s909, 256, %s7, [#allocation3], 128, 128, 8
    $region33: #{tpu_custom_call.1} parent=1 // pred_fallthru
      _
    // Predicated region
    $region34: #{tpu_custom_call.1} parent=1 // pred_check
      _
    $region35: #{tpu_custom_call.1} parent=1 // pred_check_branch
      %916 = sbr.rel (0) target = $region37
    $region36: #{tpu_custom_call.1} parent=1 // pred_region
      %917 = dma.done [#allocation3], 256
    $region37: #{tpu_custom_call.1} parent=1 // pred_fallthru
      _
    %918 = vsyncpa [#allocation3], 1

</llo_original>
